<compile_context>
chip_gen: v6e
topology: v6e:2x2x1
jax: 0.10.0
libtpu: 0.0.40
codegen_flags: <defaults>
</compile_context>

<pallas_src>
import functools

import jax
import jax.numpy as jnp
from jax.experimental import pallas as pl
from jax.experimental.pallas import tpu as pltpu

LANE = 128
DEFAULT_SCALE = 2                      # matches Scale(scale=2)

_TARGET_TILE_BYTES = 4 * 1024 * 1024   # per-block; x4 (in+out, double-buffered) = 16 MiB
_MIN_SPLIT_BYTES = 2 * 1024 * 1024     # only use a multi-step grid above this size
_MIN_PALLAS_BYTES = 256 * 1024         # below this, plain XLA multiply wins
_VMEM_LIMIT_BYTES = 32 * 1024 * 1024   # covers 4x tile bytes on every generation


# ----------------------------- Pallas kernel -------------------------------

def _scale_kernel(x_ref, o_ref, *, scale):
    # One VPU elementwise multiply per vreg on a lane-dense (tile_rows, 128) block.
    o_ref[...] = x_ref[...] * jnp.asarray(scale, o_ref.dtype)


# ----------------------------- tiling helpers -------------------------------

def _sublane_pack(dtype):
    """Native sublane packing granularity: 8 (f32), 16 (bf16), 32 (int8/fp8)."""
    itemsize = jnp.dtype(dtype).itemsize
    return max(8, 32 // itemsize)


def _choose_tile_rows(rows, dtype):
    """Fixed large tile; block row-dim is a pack multiple or the full extent."""
    pack = _sublane_pack(dtype)
    itemsize = jnp.dtype(dtype).itemsize
    row_bytes = LANE * itemsize
    target_rows = max(pack, (_TARGET_TILE_BYTES // row_bytes) // pack * pack)
    total_bytes = rows * row_bytes

    if rows <= target_rows:
        # Small/medium arrays: single full-extent block, unless big enough that
        # splitting into >=2 "parallel" grid steps pays (v7x dual TensorCore).
        if total_bytes >= _MIN_SPLIT_BYTES and rows >= 2 * pack:
            half = (-(-((rows + 1) // 2) // pack)) * pack   # ceil(rows/2) -> pack mult
            return min(half, rows)
        return rows
    return target_rows


# ----------------------------- wrapper --------------------------------------

def _scale_2d(x2d, scale, tile_rows):
    rows, lane = x2d.shape
    grid = (pl.cdiv(rows, tile_rows),)
    return pl.pallas_call(
        functools.partial(_scale_kernel, scale=scale),
        out_shape=jax.ShapeDtypeStruct((rows, lane), x2d.dtype),
        grid=grid,
        in_specs=[pl.BlockSpec((tile_rows, lane), lambda i: (i, 0))],
        out_specs=pl.BlockSpec((tile_rows, lane), lambda i: (i, 0)),
        compiler_params=pltpu.CompilerParams(
            dimension_semantics=("parallel",),
            vmem_limit_bytes=_VMEM_LIMIT_BYTES,
        ),
    )(x2d)


def scale_pallas(x, scale=DEFAULT_SCALE, *, force_pallas=False):
    """Pallas implementation of Scale.forward: returns x * scale."""
    dtype = x.dtype
    n = x.size
    itemsize = jnp.dtype(dtype).itemsize

    # Fast path: pallas_call fixed overhead dominates for tiny inputs.
    if (not force_pallas and n * itemsize < _MIN_PALLAS_BYTES) or n == 0:
        return x * jnp.asarray(scale, dtype)

    flat = x.reshape(-1)
    n_bulk = (n // LANE) * LANE
    if n_bulk == 0:
        # Fewer than 128 elements total — not worth a kernel launch.
        return x * jnp.asarray(scale, dtype)

    rows = n_bulk // LANE
    tile_rows = _choose_tile_rows(rows, dtype)

    bulk2d = flat[:n_bulk].reshape(rows, LANE)   # free view when n_bulk == n
    out_bulk = _scale_2d(bulk2d, scale, tile_rows).reshape(-1)

    if n_bulk == n:
        return out_bulk.reshape(x.shape)

    # Unaligned tail (< 128 elems): plain XLA multiply — no full-array pad/slice.
    tail = flat[n_bulk:] * jnp.asarray(scale, dtype)
    return jnp.concatenate([out_bulk, tail], axis=0).reshape(x.shape)


# ----------------------------- main ------------------------------------------

if __name__ == "__main__":
    key = jax.random.PRNGKey(0)
    k0, k1, k2 = jax.random.split(key, 3)

    # Primary test (matches the module's typical small feature map); force the
    # Pallas path so the kernel itself is exercised despite the tiny size.
    x = jax.random.normal(k0, (2, 4, 16, 16), jnp.float32)
    out = jax.block_until_ready(scale_pallas(x, DEFAULT_SCALE, force_pallas=True))
    ref = x * DEFAULT_SCALE
    assert out.shape == x.shape and out.dtype == x.dtype
    assert bool(jnp.all(jnp.isfinite(out)))
    assert bool(jnp.array_equal(out, ref)), float(jnp.max(jnp.abs(out - ref)))

    # Unaligned-size test (exercises the 128-aligned-bulk + XLA-tail path).
    y = jax.random.normal(k1, (3, 5, 7), jnp.float32)   # 105 elems, n_bulk == 0 branch
    z = jax.random.normal(k2, (6, 7, 11), jnp.float32)  # 462 elems, bulk+tail branch
    out_y = jax.block_until_ready(scale_pallas(y, DEFAULT_SCALE, force_pallas=True))
    out_z = jax.block_until_ready(scale_pallas(z, DEFAULT_SCALE, force_pallas=True))
    assert bool(jnp.array_equal(out_y, y * DEFAULT_SCALE))
    assert bool(jnp.array_equal(out_z, z * DEFAULT_SCALE))

    # Larger aligned input taking the default (non-forced) kernel path.
    w = jax.random.normal(jax.random.PRNGKey(1), (256, 4096), jnp.float32)  # 4 MiB
    out_w = jax.block_until_ready(scale_pallas(w, DEFAULT_SCALE))
    assert bool(jnp.array_equal(out_w, w * DEFAULT_SCALE))

    print("KERNEL_OK")
</pallas_src>

<mosaic_0001>
module attributes {stable_mosaic.version = 11 : i64} {
  func.func @_scale_kernel(%arg0: i32, %arg1: memref<16x128xf32, #tpu.memory_space<vmem>>, %arg2: memref<16x128xf32, #tpu.memory_space<vmem>>) attributes {dimension_semantics = [#tpu.dimension_semantics<parallel>], iteration_bounds = array<i64: 1>, scalar_prefetch = 0 : i64, scratch_operands = 0 : i64, tpu.core_type = #tpu.core_type<tc>, window_params = [{transform_indices = @transform_0, window_bounds = array<i64: 16, 128>}, {transform_indices = @transform_1, window_bounds = array<i64: 16, 128>}]} {
    %c0 = arith.constant 0 : index
    %c0_0 = arith.constant 0 : index
    %0 = vector.load %arg1[%c0, %c0_0] : memref<16x128xf32, #tpu.memory_space<vmem>>, vector<16x128xf32>
    %cst = arith.constant 2.000000e+00 : f32
    %1 = vector.broadcast %cst : f32 to vector<16x128xf32>
    %2 = arith.mulf %0, %1 : vector<16x128xf32>
    %c0_1 = arith.constant 0 : index
    %c0_2 = arith.constant 0 : index
    %3 = vector.load %arg2[%c0_1, %c0_2] : memref<16x128xf32, #tpu.memory_space<vmem>>, vector<16x128xf32>
    tpu.vector_store %arg2[%c0_1, %c0_2], %2 {strides = array<i32>} : memref<16x128xf32, #tpu.memory_space<vmem>>, vector<16x128xf32>,
    return
  }
  func.func @transform_0(%arg0: i32) -> (i32, i32) {
    %c0_i32 = arith.constant 0 : i32
    %c0_i32_0 = arith.constant 0 : i32
    return %arg0, %c0_i32 : i32, i32
  }
  func.func @transform_1(%arg0: i32) -> (i32, i32) {
    %c0_i32 = arith.constant 0 : i32
    %c0_i32_0 = arith.constant 0 : i32
    return %arg0, %c0_i32 : i32, i32
  }
}

</mosaic_0001>

<llo_original>
// kernel: tpu_custom_call.1
$region0: #{tpu_custom_call.1}
  #allocation0 [shape = 'u32[]', space=smem, size = 0x4, offset = 0x4, fixed_abs, tag = 'smem constant byte address 0x4 - core index']
  #allocation1 [shape = 'u32[144,128]{1,0:T(1,128)}', space=vmem, size = 0x12000, scoped, tag = 'internal scratch']
  %s0 = inlined_call_operand.hbm [shape: f32[16,128], index: 0, kind: input, shape index: {}]
  %s1 = inlined_call_operand.hbm [shape: f32[16,128], index: 1, kind: output, shape index: {}]
  %s2 = sld [smem:[#allocation0]]
  $region18: #{tpu_custom_call.1} parent=0
    _
  %s4 = ssub.s32 1, %s2
  %s5 = scalar_select 0, %s4, %s2
  $region1: #{tpu_custom_call.1} parent=0
    #allocation2 [shape = 'u8[8192]{0}', space=vmem, size = 0x2000, scoped, tag = 'input window, operand 0, single buffered']
    #allocation3 [shape = 's32[1]{0}', space=sflag, size = 0x4, scoped, tag = 'scoped memory for tpu_custom_call.1']
    #allocation4 [shape = 's32[1]{0}', space=sflag, size = 0x4, scoped, tag = 'scoped memory for tpu_custom_call.1']
    #allocation5 [shape = 'u8[8192]{0}', space=vmem, size = 0x2000, scoped, tag = 'output window, operand 0, single buffered']
    %6 = vsyncpa [#allocation3], 0
    %7 = vsyncpa [#allocation4], 0
    // Predicated region
    $region2: #{tpu_custom_call.1} parent=1 // pred_check
      _
    $region3: #{tpu_custom_call.1} parent=1 // pred_check_branch
      %9 = sbr.rel (0) target = $region5
    $region4: #{tpu_custom_call.1} parent=1 // pred_region
      %s11 = ssub.s32 256, 256
      %12 = vsyncadd [#allocation3], %s11
      %s13 = sshll.u32 [#allocation2], 4
      %s14 = int_to_ptr.vmem [resolvable:$true] %s13
      %19 = dma.hbm_to_vmem [thread:$0]  %s0, 256, %s14, [#allocation3], 128, 128, 8
    $region5: #{tpu_custom_call.1} parent=1 // pred_fallthru
      _
    // Predicated region
    $region6: #{tpu_custom_call.1} parent=1 // pred_check
      _
    $region7: #{tpu_custom_call.1} parent=1 // pred_check_branch
      %21 = sbr.rel (0) target = $region9
    $region8: #{tpu_custom_call.1} parent=1 // pred_region
      %22 = dma.done [#allocation3], 256
    $region9: #{tpu_custom_call.1} parent=1 // pred_fallthru
      _
    %v23 = vld [vmem:[#allocation2] sm:$0xff]
    %v24 = vld [vmem:[#allocation2 + $0x8] sm:$0xff]
    %v25 = vmul.f32 %v23, 2.0
    %v26 = vmul.f32 %v24, 2.0
    %27 = vst [vmem:[#allocation5] sm:$0xff] %v25
    %28 = vst [vmem:[#allocation5 + $0x8] sm:$0xff] %v26
    // Predicated region
    $region10: #{tpu_custom_call.1} parent=1 // pred_check
      _
    $region11: #{tpu_custom_call.1} parent=1 // pred_check_branch
      %30 = sbr.rel (0) target = $region13
    $region12: #{tpu_custom_call.1} parent=1 // pred_region
      %s32 = ssub.s32 256, 256
      %33 = vsyncadd [#allocation4], %s32
      %s34 = sshll.u32 [#allocation5], 4
      %s35 = int_to_ptr.vmem [resolvable:$true] %s34
      %40 = dma.vmem_to_hbm [thread:$0]  %s35, 256, %s1, [#allocation4], 128, 128, 8
    $region13: #{tpu_custom_call.1} parent=1 // pred_fallthru
      _
    // Predicated region
    $region14: #{tpu_custom_call.1} parent=1 // pred_check
      _
    $region15: #{tpu_custom_call.1} parent=1 // pred_check_branch
      %42 = sbr.rel (0) target = $region17
    $region16: #{tpu_custom_call.1} parent=1 // pred_region
      %43 = dma.done [#allocation4], 256
    $region17: #{tpu_custom_call.1} parent=1 // pred_fallthru
      _
    %44 = vsyncpa [#allocation3], 1
    %45 = vsyncpa [#allocation4], 1

</llo_original>
